<compile_context>
chip_gen: v7x
topology: tpu7x:2x2x1
jax: 0.10.0
libtpu: 0.0.40
codegen_flags: <defaults>
</compile_context>

<pallas_src>
import math

import jax
import jax.numpy as jnp
from jax.experimental import pallas as pl
from jax.experimental.pallas import tpu as pltpu


def vanilla_rnn_forward(x, params):
    """x: (B, T, in_size) float32.  Returns (B, T, out_size) float32."""
    wi_t, bi, wh_t, bh, wo_t, bo = params
    B, T, IN = x.shape
    H = wi_t.shape[1]
    OUT = wo_t.shape[1]

    # Fold the two bias rows once, outside the serial loop.
    b_comb = bi + bh                                   # (1, H)

    # Time-major 2-D slab; transpose/reshape are cheap XLA ops OUTSIDE the
    # kernel (in-kernel they would lower to relayout copies).
    x_tm = jnp.transpose(x, (1, 0, 2)).reshape(T * B, IN)

    def kernel(x_ref, wi_ref, b_ref, wh_ref, wo_ref, bo_ref, out_ref):
        # ---- Phase 1: hoisted, time-independent input projection ----------
        # One (T*B, IN) @ (IN, H) matmul; result stays in vregs.
        pre = (jnp.dot(x_ref[...], wi_ref[...],
                       preferred_element_type=jnp.float32)
               + b_ref[...])                           # (T*B, H), time-major

        # ---- Phase 2: serial recurrence (only h @ Wh + tanh on the chain) -
        wh = wh_ref[...]                               # load Wh once
        h = jnp.zeros((B, H), jnp.float32)             # h_0 = 0 (broadcast B)
        hs = []
        for t in range(T):                             # T small & static
            pre_t = pre[t * B:(t + 1) * B, :]          # contiguous sublanes
            h = jnp.tanh(pre_t
                         + jnp.dot(h, wh,
                                   preferred_element_type=jnp.float32))
            hs.append(h)                               # stays in vregs
        h_all = jnp.concatenate(hs, axis=0)            # (T*B, H), time-major

        # ---- Phase 3: hoisted output projection + single store ------------
        y = (jnp.dot(h_all, wo_ref[...],
                     preferred_element_type=jnp.float32)
             + bo_ref[...])                            # (T*B, OUT)
        out_ref[...] = y.astype(out_ref.dtype)

    vmem = pl.BlockSpec(memory_space=pltpu.MemorySpace.VMEM)
    out_tm = pl.pallas_call(
        kernel,
        out_shape=jax.ShapeDtypeStruct((T * B, OUT), jnp.float32),
        in_specs=[vmem, vmem, vmem, vmem, vmem, vmem],  # whole arrays, VMEM,
        out_specs=vmem,                                 # no pipeline buffers
    )(x_tm, wi_t, b_comb, wh_t, wo_t, bo)

    # Back to PyTorch layout (B, T, OUT) — again outside the kernel.
    return jnp.transpose(out_tm.reshape(T, B, OUT), (1, 0, 2))


def init_params(key, in_size, hidden_size, out_size):
    """Deterministic init mirroring nn.Linear (uniform +/- 1/sqrt(fan_in)).
    Weights are returned already transposed: (fan_in, fan_out)."""
    ks = jax.random.split(key, 6)

    def lin(kw, kb, fan_in, fan_out):
        bound = 1.0 / math.sqrt(fan_in)
        w_t = jax.random.uniform(kw, (fan_in, fan_out), jnp.float32,
                                 -bound, bound)
        b = jax.random.uniform(kb, (1, fan_out), jnp.float32, -bound, bound)
        return w_t, b

    wi_t, bi = lin(ks[0], ks[1], in_size, hidden_size)      # i2h
    wh_t, bh = lin(ks[2], ks[3], hidden_size, hidden_size)  # h2h
    wo_t, bo = lin(ks[4], ks[5], hidden_size, out_size)     # h2o
    return wi_t, bi, wh_t, bh, wo_t, bo


def _reference(x, params):
    """Pure-JAX reference of the PyTorch forward (for correctness check)."""
    wi_t, bi, wh_t, bh, wo_t, bo = params
    B = x.shape[0]
    H = wi_t.shape[1]

    def step(h, x_t):
        h_new = jnp.tanh(x_t @ wi_t + bi + h @ wh_t + bh)
        y = h_new @ wo_t + bo
        return h_new, y

    h0 = jnp.zeros((B, H), jnp.float32)
    _, ys = jax.lax.scan(step, h0, jnp.transpose(x, (1, 0, 2)))
    return jnp.transpose(ys, (1, 0, 2))


if __name__ == "__main__":
    B, T, IN, H, OUT = 2, 8, 4, 32, 4

    key = jax.random.PRNGKey(0)
    kx, kp = jax.random.split(key)
    x = jax.random.normal(kx, (B, T, IN), jnp.float32)
    params = init_params(kp, IN, H, OUT)

    out = vanilla_rnn_forward(x, params)
    out = jax.block_until_ready(out)

    ref = _reference(x, params)
    assert out.shape == (B, T, OUT)
    assert jnp.allclose(out, ref, atol=1e-5, rtol=1e-5)

    print("KERNEL_OK")
</pallas_src>

<mosaic_0001>
module attributes {stable_mosaic.version = 11 : i64} {
  func.func @kernel(%arg0: memref<16x4xf32, #tpu.memory_space<vmem>>, %arg1: memref<4x32xf32, #tpu.memory_space<vmem>>, %arg2: memref<1x32xf32, #tpu.memory_space<vmem>>, %arg3: memref<32x32xf32, #tpu.memory_space<vmem>>, %arg4: memref<32x4xf32, #tpu.memory_space<vmem>>, %arg5: memref<1x4xf32, #tpu.memory_space<vmem>>, %arg6: memref<16x4xf32, #tpu.memory_space<vmem>>) attributes {dimension_semantics = [], scalar_prefetch = 0 : i64, scratch_operands = 0 : i64, tpu.core_type = #tpu.core_type<tc>} {
    %c0 = arith.constant 0 : index
    %c0_0 = arith.constant 0 : index
    %0 = vector.load %arg0[%c0, %c0_0] : memref<16x4xf32, #tpu.memory_space<vmem>>, vector<16x4xf32>
    %c0_1 = arith.constant 0 : index
    %c0_2 = arith.constant 0 : index
    %1 = vector.load %arg1[%c0_1, %c0_2] : memref<4x32xf32, #tpu.memory_space<vmem>>, vector<4x32xf32>
    %cst = arith.constant dense<0.000000e+00> : vector<16x32xf32>
    %2 = tpu.matmul %0, %1, %cst {dimension_numbers = #tpu.dot_dimension_numbers<[1], [0], [0], [1], [0, 0, 1, 1], [], []>} : vector<16x4xf32>, vector<4x32xf32>, vector<16x32xf32> -> vector<16x32xf32>
    %c0_3 = arith.constant 0 : index
    %c0_4 = arith.constant 0 : index
    %3 = vector.load %arg2[%c0_3, %c0_4] : memref<1x32xf32, #tpu.memory_space<vmem>>, vector<1x32xf32>
    %4 = vector.broadcast %3 : vector<1x32xf32> to vector<16x32xf32>
    %5 = arith.addf %2, %4 : vector<16x32xf32>
    %c0_5 = arith.constant 0 : index
    %c0_6 = arith.constant 0 : index
    %6 = vector.load %arg3[%c0_5, %c0_6] : memref<32x32xf32, #tpu.memory_space<vmem>>, vector<32x32xf32>
    %cst_7 = arith.constant 0.000000e+00 : f32
    %7 = vector.broadcast %cst_7 : f32 to vector<2x32xf32>
    %8 = vector.extract_strided_slice %5 {offsets = [0, 0], sizes = [2, 32], strides = [1, 1]} : vector<16x32xf32> to vector<2x32xf32>
    %cst_8 = arith.constant dense<0.000000e+00> : vector<2x32xf32>
    %9 = tpu.matmul %7, %6, %cst_8 {dimension_numbers = #tpu.dot_dimension_numbers<[1], [0], [0], [1], [0, 0, 1, 1], [], []>} : vector<2x32xf32>, vector<32x32xf32>, vector<2x32xf32> -> vector<2x32xf32>
    %10 = arith.addf %8, %9 : vector<2x32xf32>
    %11 = math.tanh %10 : vector<2x32xf32>
    %12 = vector.extract_strided_slice %5 {offsets = [2, 0], sizes = [2, 32], strides = [1, 1]} : vector<16x32xf32> to vector<2x32xf32>
    %cst_9 = arith.constant dense<0.000000e+00> : vector<2x32xf32>
    %13 = tpu.matmul %11, %6, %cst_9 {dimension_numbers = #tpu.dot_dimension_numbers<[1], [0], [0], [1], [0, 0, 1, 1], [], []>} : vector<2x32xf32>, vector<32x32xf32>, vector<2x32xf32> -> vector<2x32xf32>
    %14 = arith.addf %12, %13 : vector<2x32xf32>
    %15 = math.tanh %14 : vector<2x32xf32>
    %16 = vector.extract_strided_slice %5 {offsets = [4, 0], sizes = [2, 32], strides = [1, 1]} : vector<16x32xf32> to vector<2x32xf32>
    %cst_10 = arith.constant dense<0.000000e+00> : vector<2x32xf32>
    %17 = tpu.matmul %15, %6, %cst_10 {dimension_numbers = #tpu.dot_dimension_numbers<[1], [0], [0], [1], [0, 0, 1, 1], [], []>} : vector<2x32xf32>, vector<32x32xf32>, vector<2x32xf32> -> vector<2x32xf32>
    %18 = arith.addf %16, %17 : vector<2x32xf32>
    %19 = math.tanh %18 : vector<2x32xf32>
    %20 = vector.extract_strided_slice %5 {offsets = [6, 0], sizes = [2, 32], strides = [1, 1]} : vector<16x32xf32> to vector<2x32xf32>
    %cst_11 = arith.constant dense<0.000000e+00> : vector<2x32xf32>
    %21 = tpu.matmul %19, %6, %cst_11 {dimension_numbers = #tpu.dot_dimension_numbers<[1], [0], [0], [1], [0, 0, 1, 1], [], []>} : vector<2x32xf32>, vector<32x32xf32>, vector<2x32xf32> -> vector<2x32xf32>
    %22 = arith.addf %20, %21 : vector<2x32xf32>
    %23 = math.tanh %22 : vector<2x32xf32>
    %24 = vector.extract_strided_slice %5 {offsets = [8, 0], sizes = [2, 32], strides = [1, 1]} : vector<16x32xf32> to vector<2x32xf32>
    %cst_12 = arith.constant dense<0.000000e+00> : vector<2x32xf32>
    %25 = tpu.matmul %23, %6, %cst_12 {dimension_numbers = #tpu.dot_dimension_numbers<[1], [0], [0], [1], [0, 0, 1, 1], [], []>} : vector<2x32xf32>, vector<32x32xf32>, vector<2x32xf32> -> vector<2x32xf32>
    %26 = arith.addf %24, %25 : vector<2x32xf32>
    %27 = math.tanh %26 : vector<2x32xf32>
    %28 = vector.extract_strided_slice %5 {offsets = [10, 0], sizes = [2, 32], strides = [1, 1]} : vector<16x32xf32> to vector<2x32xf32>
    %cst_13 = arith.constant dense<0.000000e+00> : vector<2x32xf32>
    %29 = tpu.matmul %27, %6, %cst_13 {dimension_numbers = #tpu.dot_dimension_numbers<[1], [0], [0], [1], [0, 0, 1, 1], [], []>} : vector<2x32xf32>, vector<32x32xf32>, vector<2x32xf32> -> vector<2x32xf32>
    %30 = arith.addf %28, %29 : vector<2x32xf32>
    %31 = math.tanh %30 : vector<2x32xf32>
    %32 = vector.extract_strided_slice %5 {offsets = [12, 0], sizes = [2, 32], strides = [1, 1]} : vector<16x32xf32> to vector<2x32xf32>
    %cst_14 = arith.constant dense<0.000000e+00> : vector<2x32xf32>
    %33 = tpu.matmul %31, %6, %cst_14 {dimension_numbers = #tpu.dot_dimension_numbers<[1], [0], [0], [1], [0, 0, 1, 1], [], []>} : vector<2x32xf32>, vector<32x32xf32>, vector<2x32xf32> -> vector<2x32xf32>
    %34 = arith.addf %32, %33 : vector<2x32xf32>
    %35 = math.tanh %34 : vector<2x32xf32>
    %36 = vector.extract_strided_slice %5 {offsets = [14, 0], sizes = [2, 32], strides = [1, 1]} : vector<16x32xf32> to vector<2x32xf32>
    %cst_15 = arith.constant dense<0.000000e+00> : vector<2x32xf32>
    %37 = tpu.matmul %35, %6, %cst_15 {dimension_numbers = #tpu.dot_dimension_numbers<[1], [0], [0], [1], [0, 0, 1, 1], [], []>} : vector<2x32xf32>, vector<32x32xf32>, vector<2x32xf32> -> vector<2x32xf32>
    %38 = arith.addf %36, %37 : vector<2x32xf32>
    %39 = math.tanh %38 : vector<2x32xf32>
    %40 = tpu.concatenate %11, %15, %19, %23, %27, %31, %35, %39 in 0 : vector<2x32xf32>, vector<2x32xf32>, vector<2x32xf32>, vector<2x32xf32>, vector<2x32xf32>, vector<2x32xf32>, vector<2x32xf32>, vector<2x32xf32> -> vector<16x32xf32>
    %c0_16 = arith.constant 0 : index
    %c0_17 = arith.constant 0 : index
    %41 = vector.load %arg4[%c0_16, %c0_17] : memref<32x4xf32, #tpu.memory_space<vmem>>, vector<32x4xf32>
    %cst_18 = arith.constant dense<0.000000e+00> : vector<16x4xf32>
    %42 = tpu.matmul %40, %41, %cst_18 {dimension_numbers = #tpu.dot_dimension_numbers<[1], [0], [0], [1], [0, 0, 1, 1], [], []>} : vector<16x32xf32>, vector<32x4xf32>, vector<16x4xf32> -> vector<16x4xf32>
    %c0_19 = arith.constant 0 : index
    %c0_20 = arith.constant 0 : index
    %43 = vector.load %arg5[%c0_19, %c0_20] : memref<1x4xf32, #tpu.memory_space<vmem>>, vector<1x4xf32>
    %44 = vector.broadcast %43 : vector<1x4xf32> to vector<16x4xf32>
    %45 = arith.addf %42, %44 : vector<16x4xf32>
    %c0_21 = arith.constant 0 : index
    %c0_22 = arith.constant 0 : index
    %46 = vector.load %arg6[%c0_21, %c0_22] : memref<16x4xf32, #tpu.memory_space<vmem>>, vector<16x4xf32>
    tpu.vector_store %arg6[%c0_21, %c0_22], %45 {strides = array<i32>} : memref<16x4xf32, #tpu.memory_space<vmem>>, vector<16x4xf32>,
    return
  }
}

</mosaic_0001>

<llo_original>
// kernel: tpu_custom_call.1
$region0: #{tpu_custom_call.1}
  #allocation0 [shape = 'u32[]', space=smem, size = 0x4, offset = 0x4, fixed_abs, tag = 'smem constant byte address 0x4 - core index']
  #allocation1 [shape = 'u32[144,128]{1,0:T(1,128)}', space=vmem, size = 0x12000, scoped, tag = 'internal scratch']
  %s0 = inlined_call_operand.vmem [shape: f32[16,4], index: 0, kind: input, shape index: {}]
  %s1 = inlined_call_operand.vmem [shape: f32[4,32], index: 1, kind: input, shape index: {}]
  %s2 = inlined_call_operand.vmem [shape: f32[1,32], index: 2, kind: input, shape index: {}]
  %s3 = inlined_call_operand.vmem [shape: f32[32,32], index: 3, kind: input, shape index: {}]
  %s4 = inlined_call_operand.vmem [shape: f32[32,4], index: 4, kind: input, shape index: {}]
  %s5 = inlined_call_operand.vmem [shape: f32[1,4], index: 5, kind: input, shape index: {}]
  %s6 = inlined_call_operand.vmem [shape: f32[16,4], index: 6, kind: output, shape index: {}]
  %s7 = sld [smem:[#allocation0]]
  $region34: #{tpu_custom_call.1} parent=0
    _
  %s9 = ssub.s32 1, %s7
  %s10 = scalar_select 0, %s9, %s7
  // Predicated region
  $region2: #{tpu_custom_call.1} parent=0 // pred_check
    _
  $region3: #{tpu_custom_call.1} parent=0 // pred_check_branch
    %12 = sbr.rel (0) target = $region5
  $region4: #{tpu_custom_call.1} parent=0 // pred_region
    _
  $region5: #{tpu_custom_call.1} parent=0 // pred_fallthru
    _
  // Predicated region
  $region6: #{tpu_custom_call.1} parent=0 // pred_check
    _
  $region7: #{tpu_custom_call.1} parent=0 // pred_check_branch
    %14 = sbr.rel (0) target = $region9
  $region8: #{tpu_custom_call.1} parent=0 // pred_region
    _
  $region9: #{tpu_custom_call.1} parent=0 // pred_fallthru
    _
  // Predicated region
  $region10: #{tpu_custom_call.1} parent=0 // pred_check
    _
  $region11: #{tpu_custom_call.1} parent=0 // pred_check_branch
    %16 = sbr.rel (0) target = $region13
  $region12: #{tpu_custom_call.1} parent=0 // pred_region
    _
  $region13: #{tpu_custom_call.1} parent=0 // pred_fallthru
    _
  // Predicated region
  $region14: #{tpu_custom_call.1} parent=0 // pred_check
    _
  $region15: #{tpu_custom_call.1} parent=0 // pred_check_branch
    %18 = sbr.rel (0) target = $region17
  $region16: #{tpu_custom_call.1} parent=0 // pred_region
    _
  $region17: #{tpu_custom_call.1} parent=0 // pred_fallthru
    _
  // Predicated region
  $region18: #{tpu_custom_call.1} parent=0 // pred_check
    _
  $region19: #{tpu_custom_call.1} parent=0 // pred_check_branch
    %20 = sbr.rel (0) target = $region21
  $region20: #{tpu_custom_call.1} parent=0 // pred_region
    _
  $region21: #{tpu_custom_call.1} parent=0 // pred_fallthru
    _
  // Predicated region
  $region22: #{tpu_custom_call.1} parent=0 // pred_check
    _
  $region23: #{tpu_custom_call.1} parent=0 // pred_check_branch
    %22 = sbr.rel (0) target = $region25
  $region24: #{tpu_custom_call.1} parent=0 // pred_region
    _
  $region25: #{tpu_custom_call.1} parent=0 // pred_fallthru
    _
  %v23 = vld [vmem:[%s0] sm:$0xff]
  %v24 = vld [vmem:[%s0 + $0x8] sm:$0xff]
  %v25 = vld [vmem:[%s1] sm:$0xf]
  %v26 = vld [vmem:[%s2] sm:$0x1]
  %v28 = vlaneseq
  %v29 = vshrl.u32 %v28, 7
  %v30 = vsub.s32 0, %v29
  %v31 = vrot.slane %v26, %v30
  %vm33 = vcmask 31744
  %v35 = vsel %vm33, %v23, 0
  %v38 = vsel %vm33, %v24, 0
  %vm40 = vcmask 1043456
  %v42 = vsel %vm40, %v25, 0
  %44 = vmatprep.subr.mxu0 0.0
  %45 = vmatpush1.msra.mxu0 %v42
  %46 = vmatprep.subr.mxu0 0.0
  %47 = vmatpush1.msra.mxu0 0.0
  %48 = vmatprep.subr.mxu0 0.0
  %49 = vmatpush1.msra.mxu0 0.0
  %50 = vmatprep.subr.mxu0 0.0
  %51 = vmatpush1.msra.mxu0 0.0
  %52 = vmatprep.subr.mxu0 0.0
  %53 = vmatpush1.msra.mxu0 0.0
  %54 = vmatprep.subr.mxu0 0.0
  %55 = vmatpush1.msra.mxu0 0.0
  %56 = vmatprep.subr.mxu0 0.0
  %57 = vmatpush1.msra.mxu0 0.0
  %58 = vmatprep.subr.mxu0 0.0
  %59 = vmatpush1.msra.mxu0 0.0
  %60 = vmatprep.subr.mxu0 0.0
  %61 = vmatpush1.msra.mxu0 0.0
  %62 = vmatprep.subr.mxu0 0.0
  %63 = vmatpush1.msra.mxu0 0.0
  %64 = vmatprep.subr.mxu0 0.0
  %65 = vmatpush1.msra.mxu0 0.0
  %66 = vmatprep.subr.mxu0 0.0
  %67 = vmatpush1.msra.mxu0 0.0
  %68 = vmatprep.subr.mxu0 0.0
  %69 = vmatpush1.msra.mxu0 0.0
  %70 = vmatprep.subr.mxu0 0.0
  %71 = vmatpush1.msra.mxu0 0.0
  %72 = vmatprep.subr.mxu0 0.0
  %73 = vmatpush1.msra.mxu0 0.0
  %74 = vmatprep.subr.mxu0 0.0
  %75 = vmatpush1.msra.mxu0 0.0
  %76 = vmatprep.subr.mxu0 0.0
  %77 = vmatpush1.msra.mxu0 0.0
  %78 = vmatprep.subr.mxu0 0.0
  %79 = vmatpush1.msra.mxu0 0.0
  %80 = vmatprep.subr.mxu0 0.0
  %81 = vmatpush1.msra.mxu0 0.0
  %82 = vmatprep.subr.mxu0 0.0
  %83 = vmatpush1.msra.mxu0 0.0
  %84 = vmatprep.subr.mxu0 0.0
  %85 = vmatpush1.msra.mxu0 0.0
  %86 = vmatprep.subr.mxu0 0.0
  %87 = vmatpush1.msra.mxu0 0.0
  %88 = vmatprep.subr.mxu0 0.0
  %89 = vmatpush1.msra.mxu0 0.0
  %90 = vmatprep.subr.mxu0 0.0
  %91 = vmatpush1.msra.mxu0 0.0
  %92 = vmatprep.subr.mxu0 0.0
  %93 = vmatpush1.msra.mxu0 0.0
  %94 = vmatprep.subr.mxu0 0.0
  %95 = vmatpush1.msra.mxu0 0.0
  %96 = vmatprep.subr.mxu0 0.0
  %97 = vmatpush1.msra.mxu0 0.0
  %98 = vmatprep.subr.mxu0 0.0
  %99 = vmatpush1.msra.mxu0 0.0
  %100 = vmatprep.subr.mxu0 0.0
  %101 = vmatpush1.msra.mxu0 0.0
  %102 = vmatprep.subr.mxu0 0.0
  %103 = vmatpush1.msra.mxu0 0.0
  %104 = vmatprep.subr.mxu0 0.0
  %105 = vmatpush1.msra.mxu0 0.0
  %106 = vmatprep.subr.mxu0 0.0
  %107 = vmatpush1.msra.mxu0 0.0
  %108 = vmatprep.mubr.f32.mxu0 0.0
  %109 = vmatmul.mubr.f32.gmra.mrb[0].mxu0 %v35
  %v110 = vpop.f32.mrb[0].mxu0
  %v111 = vadd.f32 %v31, %v110
  %v112 = vpop.f32.mrb[0].mxu0
  %113 = vmatprep.mubr.f32.mxu0 0.0
  %114 = vmatmul.mubr.f32.gmra.mrb[0].mxu0 %v38
  %v115 = vpop.f32.mrb[0].mxu0
  %v116 = vadd.f32 %v31, %v115
  %v117 = vpop.f32.mrb[0].mxu0
  %118 = vdwg.mxu0
  %v119 = vld [vmem:[%s3] sm:$0xff]
  %v120 = vld [vmem:[%s3 + $0x8] sm:$0xff]
  %v121 = vld [vmem:[%s3 + $0x10] sm:$0xff]
  %v122 = vld [vmem:[%s3 + $0x18] sm:$0xff]
  %vm123 = vcmask 261120
  %v125 = vsel %vm123, 0.0, 0
  %127 = vmatprep.subr.mxu0 0.0
  %128 = vmatpush1.msra.mxu0 %v119
  %129 = vmatprep.subr.mxu0 0.0
  %130 = vmatpush1.msra.mxu0 %v120
  %131 = vmatprep.subr.mxu0 0.0
  %132 = vmatpush1.msra.mxu0 %v121
  %133 = vmatprep.subr.mxu0 0.0
  %134 = vmatpush1.msra.mxu0 %v122
  %135 = vmatprep.subr.mxu0 0.0
  %136 = vmatpush1.msra.mxu0 0.0
  %137 = vmatprep.subr.mxu0 0.0
  %138 = vmatpush1.msra.mxu0 0.0
  %139 = vmatprep.subr.mxu0 0.0
  %140 = vmatpush1.msra.mxu0 0.0
  %141 = vmatprep.subr.mxu0 0.0
  %142 = vmatpush1.msra.mxu0 0.0
  %143 = vmatprep.subr.mxu0 0.0
  %144 = vmatpush1.msra.mxu0 0.0
  %145 = vmatprep.subr.mxu0 0.0
  %146 = vmatpush1.msra.mxu0 0.0
  %147 = vmatprep.subr.mxu0 0.0
  %148 = vmatpush1.msra.mxu0 0.0
  %149 = vmatprep.subr.mxu0 0.0
  %150 = vmatpush1.msra.mxu0 0.0
  %151 = vmatprep.subr.mxu0 0.0
  %152 = vmatpush1.msra.mxu0 0.0
  %153 = vmatprep.subr.mxu0 0.0
  %154 = vmatpush1.msra.mxu0 0.0
  %155 = vmatprep.subr.mxu0 0.0
  %156 = vmatpush1.msra.mxu0 0.0
  %157 = vmatprep.subr.mxu0 0.0
  %158 = vmatpush1.msra.mxu0 0.0
  %159 = vmatprep.subr.mxu0 0.0
  %160 = vmatpush1.msra.mxu0 0.0
  %161 = vmatprep.subr.mxu0 0.0
  %162 = vmatpush1.msra.mxu0 0.0
  %163 = vmatprep.subr.mxu0 0.0
  %164 = vmatpush1.msra.mxu0 0.0
  %165 = vmatprep.subr.mxu0 0.0
  %166 = vmatpush1.msra.mxu0 0.0
  %167 = vmatprep.subr.mxu0 0.0
  %168 = vmatpush1.msra.mxu0 0.0
  %169 = vmatprep.subr.mxu0 0.0
  %170 = vmatpush1.msra.mxu0 0.0
  %171 = vmatprep.subr.mxu0 0.0
  %172 = vmatpush1.msra.mxu0 0.0
  %173 = vmatprep.subr.mxu0 0.0
  %174 = vmatpush1.msra.mxu0 0.0
  %175 = vmatprep.subr.mxu0 0.0
  %176 = vmatpush1.msra.mxu0 0.0
  %177 = vmatprep.subr.mxu0 0.0
  %178 = vmatpush1.msra.mxu0 0.0
  %179 = vmatprep.subr.mxu0 0.0
  %180 = vmatpush1.msra.mxu0 0.0
  %181 = vmatprep.subr.mxu0 0.0
  %182 = vmatpush1.msra.mxu0 0.0
  %183 = vmatprep.subr.mxu0 0.0
  %184 = vmatpush1.msra.mxu0 0.0
  %185 = vmatprep.subr.mxu0 0.0
  %186 = vmatpush1.msra.mxu0 0.0
  %187 = vmatprep.subr.mxu0 0.0
  %188 = vmatpush1.msra.mxu0 0.0
  %189 = vmatprep.subr.mxu0 0.0
  %190 = vmatpush1.msra.mxu0 0.0
  %191 = vmatprep.mubr.f32.mxu0 0.0
  %192 = vmatmul.mubr.f32.gmra.mrb[0].mxu0 %v125
  %v193 = vpop.f32.mrb[0].mxu0
  %v194 = vadd.f32 0.0, %v193
  %v195 = vpop.f32.mrb[0].mxu0
  %196 = vdwg.mxu0
  %v197 = vadd.f32 %v111, %v194
  %v198 = vtanh.pop %v197
  %v200 = vsel %vm123, %v198, 0
  %202 = vmatprep.subr.mxu0 0.0
  %203 = vmatpush1.msra.mxu0 %v119
  %204 = vmatprep.subr.mxu0 0.0
  %205 = vmatpush1.msra.mxu0 %v120
  %206 = vmatprep.subr.mxu0 0.0
  %207 = vmatpush1.msra.mxu0 %v121
  %208 = vmatprep.subr.mxu0 0.0
  %209 = vmatpush1.msra.mxu0 %v122
  %210 = vmatprep.subr.mxu0 0.0
  %211 = vmatpush1.msra.mxu0 0.0
  %212 = vmatprep.subr.mxu0 0.0
  %213 = vmatpush1.msra.mxu0 0.0
  %214 = vmatprep.subr.mxu0 0.0
  %215 = vmatpush1.msra.mxu0 0.0
  %216 = vmatprep.subr.mxu0 0.0
  %217 = vmatpush1.msra.mxu0 0.0
  %218 = vmatprep.subr.mxu0 0.0
  %219 = vmatpush1.msra.mxu0 0.0
  %220 = vmatprep.subr.mxu0 0.0
  %221 = vmatpush1.msra.mxu0 0.0
  %222 = vmatprep.subr.mxu0 0.0
  %223 = vmatpush1.msra.mxu0 0.0
  %224 = vmatprep.subr.mxu0 0.0
  %225 = vmatpush1.msra.mxu0 0.0
  %226 = vmatprep.subr.mxu0 0.0
  %227 = vmatpush1.msra.mxu0 0.0
  %228 = vmatprep.subr.mxu0 0.0
  %229 = vmatpush1.msra.mxu0 0.0
  %230 = vmatprep.subr.mxu0 0.0
  %231 = vmatpush1.msra.mxu0 0.0
  %232 = vmatprep.subr.mxu0 0.0
  %233 = vmatpush1.msra.mxu0 0.0
  %234 = vmatprep.subr.mxu0 0.0
  %235 = vmatpush1.msra.mxu0 0.0
  %236 = vmatprep.subr.mxu0 0.0
  %237 = vmatpush1.msra.mxu0 0.0
  %238 = vmatprep.subr.mxu0 0.0
  %239 = vmatpush1.msra.mxu0 0.0
  %240 = vmatprep.subr.mxu0 0.0
  %241 = vmatpush1.msra.mxu0 0.0
  %242 = vmatprep.subr.mxu0 0.0
  %243 = vmatpush1.msra.mxu0 0.0
  %244 = vmatprep.subr.mxu0 0.0
  %245 = vmatpush1.msra.mxu0 0.0
  %246 = vmatprep.subr.mxu0 0.0
  %247 = vmatpush1.msra.mxu0 0.0
  %248 = vmatprep.subr.mxu0 0.0
  %249 = vmatpush1.msra.mxu0 0.0
  %250 = vmatprep.subr.mxu0 0.0
  %251 = vmatpush1.msra.mxu0 0.0
  %252 = vmatprep.subr.mxu0 0.0
  %253 = vmatpush1.msra.mxu0 0.0
  %254 = vmatprep.subr.mxu0 0.0
  %255 = vmatpush1.msra.mxu0 0.0
  %256 = vmatprep.subr.mxu0 0.0
  %257 = vmatpush1.msra.mxu0 0.0
  %258 = vmatprep.subr.mxu0 0.0
  %259 = vmatpush1.msra.mxu0 0.0
  %260 = vmatprep.subr.mxu0 0.0
  %261 = vmatpush1.msra.mxu0 0.0
  %262 = vmatprep.subr.mxu0 0.0
  %263 = vmatpush1.msra.mxu0 0.0
  %264 = vmatprep.subr.mxu0 0.0
  %265 = vmatpush1.msra.mxu0 0.0
  %266 = vmatprep.mubr.f32.mxu0 0.0
  %267 = vmatmul.mubr.f32.gmra.mrb[0].mxu0 %v200
  %v268 = vpop.f32.mrb[0].mxu0
  %v269 = vadd.f32 0.0, %v268
  %v270 = vpop.f32.mrb[0].mxu0
  %271 = vdwg.mxu0
  %v273 = vrot.slane %v269, 6
  %v275 = vadd.f32 %v111, %v273
  %v276 = vtanh.pop %v275
  %v278 = vrot.slane %v276, 2
  %v279 = vsel %vm123, %v278, 0
  %281 = vmatprep.subr.mxu0 0.0
  %282 = vmatpush1.msra.mxu0 %v119
  %283 = vmatprep.subr.mxu0 0.0
  %284 = vmatpush1.msra.mxu0 %v120
  %285 = vmatprep.subr.mxu0 0.0
  %286 = vmatpush1.msra.mxu0 %v121
  %287 = vmatprep.subr.mxu0 0.0
  %288 = vmatpush1.msra.mxu0 %v122
  %289 = vmatprep.subr.mxu0 0.0
  %290 = vmatpush1.msra.mxu0 0.0
  %291 = vmatprep.subr.mxu0 0.0
  %292 = vmatpush1.msra.mxu0 0.0
  %293 = vmatprep.subr.mxu0 0.0
  %294 = vmatpush1.msra.mxu0 0.0
  %295 = vmatprep.subr.mxu0 0.0
  %296 = vmatpush1.msra.mxu0 0.0
  %297 = vmatprep.subr.mxu0 0.0
  %298 = vmatpush1.msra.mxu0 0.0
  %299 = vmatprep.subr.mxu0 0.0
  %300 = vmatpush1.msra.mxu0 0.0
  %301 = vmatprep.subr.mxu0 0.0
  %302 = vmatpush1.msra.mxu0 0.0
  %303 = vmatprep.subr.mxu0 0.0
  %304 = vmatpush1.msra.mxu0 0.0
  %305 = vmatprep.subr.mxu0 0.0
  %306 = vmatpush1.msra.mxu0 0.0
  %307 = vmatprep.subr.mxu0 0.0
  %308 = vmatpush1.msra.mxu0 0.0
  %309 = vmatprep.subr.mxu0 0.0
  %310 = vmatpush1.msra.mxu0 0.0
  %311 = vmatprep.subr.mxu0 0.0
  %312 = vmatpush1.msra.mxu0 0.0
  %313 = vmatprep.subr.mxu0 0.0
  %314 = vmatpush1.msra.mxu0 0.0
  %315 = vmatprep.subr.mxu0 0.0
  %316 = vmatpush1.msra.mxu0 0.0
  %317 = vmatprep.subr.mxu0 0.0
  %318 = vmatpush1.msra.mxu0 0.0
  %319 = vmatprep.subr.mxu0 0.0
  %320 = vmatpush1.msra.mxu0 0.0
  %321 = vmatprep.subr.mxu0 0.0
  %322 = vmatpush1.msra.mxu0 0.0
  %323 = vmatprep.subr.mxu0 0.0
  %324 = vmatpush1.msra.mxu0 0.0
  %325 = vmatprep.subr.mxu0 0.0
  %326 = vmatpush1.msra.mxu0 0.0
  %327 = vmatprep.subr.mxu0 0.0
  %328 = vmatpush1.msra.mxu0 0.0
  %329 = vmatprep.subr.mxu0 0.0
  %330 = vmatpush1.msra.mxu0 0.0
  %331 = vmatprep.subr.mxu0 0.0
  %332 = vmatpush1.msra.mxu0 0.0
  %333 = vmatprep.subr.mxu0 0.0
  %334 = vmatpush1.msra.mxu0 0.0
  %335 = vmatprep.subr.mxu0 0.0
  %336 = vmatpush1.msra.mxu0 0.0
  %337 = vmatprep.subr.mxu0 0.0
  %338 = vmatpush1.msra.mxu0 0.0
  %339 = vmatprep.subr.mxu0 0.0
  %340 = vmatpush1.msra.mxu0 0.0
  %341 = vmatprep.subr.mxu0 0.0
  %342 = vmatpush1.msra.mxu0 0.0
  %343 = vmatprep.subr.mxu0 0.0
  %344 = vmatpush1.msra.mxu0 0.0
  %345 = vmatprep.mubr.f32.mxu0 0.0
  %346 = vmatmul.mubr.f32.gmra.mrb[0].mxu0 %v279
  %v347 = vpop.f32.mrb[0].mxu0
  %v348 = vadd.f32 0.0, %v347
  %v349 = vpop.f32.mrb[0].mxu0
  %350 = vdwg.mxu0
  %v352 = vrot.slane %v348, 4
  %v354 = vadd.f32 %v111, %v352
  %v355 = vtanh.pop %v354
  %v357 = vrot.slane %v355, 4
  %v358 = vsel %vm123, %v357, 0
  %360 = vmatprep.subr.mxu0 0.0
  %361 = vmatpush1.msra.mxu0 %v119
  %362 = vmatprep.subr.mxu0 0.0
  %363 = vmatpush1.msra.mxu0 %v120
  %364 = vmatprep.subr.mxu0 0.0
  %365 = vmatpush1.msra.mxu0 %v121
  %366 = vmatprep.subr.mxu0 0.0
  %367 = vmatpush1.msra.mxu0 %v122
  %368 = vmatprep.subr.mxu0 0.0
  %369 = vmatpush1.msra.mxu0 0.0
  %370 = vmatprep.subr.mxu0 0.0
  %371 = vmatpush1.msra.mxu0 0.0
  %372 = vmatprep.subr.mxu0 0.0
  %373 = vmatpush1.msra.mxu0 0.0
  %374 = vmatprep.subr.mxu0 0.0
  %375 = vmatpush1.msra.mxu0 0.0
  %376 = vmatprep.subr.mxu0 0.0
  %377 = vmatpush1.msra.mxu0 0.0
  %378 = vmatprep.subr.mxu0 0.0
  %379 = vmatpush1.msra.mxu0 0.0
  %380 = vmatprep.subr.mxu0 0.0
  %381 = vmatpush1.msra.mxu0 0.0
  %382 = vmatprep.subr.mxu0 0.0
  %383 = vmatpush1.msra.mxu0 0.0
  %384 = vmatprep.subr.mxu0 0.0
  %385 = vmatpush1.msra.mxu0 0.0
  %386 = vmatprep.subr.mxu0 0.0
  %387 = vmatpush1.msra.mxu0 0.0
  %388 = vmatprep.subr.mxu0 0.0
  %389 = vmatpush1.msra.mxu0 0.0
  %390 = vmatprep.subr.mxu0 0.0
  %391 = vmatpush1.msra.mxu0 0.0
  %392 = vmatprep.subr.mxu0 0.0
  %393 = vmatpush1.msra.mxu0 0.0
  %394 = vmatprep.subr.mxu0 0.0
  %395 = vmatpush1.msra.mxu0 0.0
  %396 = vmatprep.subr.mxu0 0.0
  %397 = vmatpush1.msra.mxu0 0.0
  %398 = vmatprep.subr.mxu0 0.0
  %399 = vmatpush1.msra.mxu0 0.0
  %400 = vmatprep.subr.mxu0 0.0
  %401 = vmatpush1.msra.mxu0 0.0
  %402 = vmatprep.subr.mxu0 0.0
  %403 = vmatpush1.msra.mxu0 0.0
  %404 = vmatprep.subr.mxu0 0.0
  %405 = vmatpush1.msra.mxu0 0.0
  %406 = vmatprep.subr.mxu0 0.0
  %407 = vmatpush1.msra.mxu0 0.0
  %408 = vmatprep.subr.mxu0 0.0
  %409 = vmatpush1.msra.mxu0 0.0
  %410 = vmatprep.subr.mxu0 0.0
  %411 = vmatpush1.msra.mxu0 0.0
  %412 = vmatprep.subr.mxu0 0.0
  %413 = vmatpush1.msra.mxu0 0.0
  %414 = vmatprep.subr.mxu0 0.0
  %415 = vmatpush1.msra.mxu0 0.0
  %416 = vmatprep.subr.mxu0 0.0
  %417 = vmatpush1.msra.mxu0 0.0
  %418 = vmatprep.subr.mxu0 0.0
  %419 = vmatpush1.msra.mxu0 0.0
  %420 = vmatprep.subr.mxu0 0.0
  %421 = vmatpush1.msra.mxu0 0.0
  %422 = vmatprep.subr.mxu0 0.0
  %423 = vmatpush1.msra.mxu0 0.0
  %424 = vmatprep.mubr.f32.mxu0 0.0
  %425 = vmatmul.mubr.f32.gmra.mrb[0].mxu0 %v358
  %v426 = vpop.f32.mrb[0].mxu0
  %v427 = vadd.f32 0.0, %v426
  %v428 = vpop.f32.mrb[0].mxu0
  %429 = vdwg.mxu0
  %v431 = vrot.slane %v427, 2
  %v433 = vadd.f32 %v111, %v431
  %v434 = vtanh.pop %v433
  %v436 = vrot.slane %v434, 6
  %v437 = vsel %vm123, %v436, 0
  %439 = vmatprep.subr.mxu0 0.0
  %440 = vmatpush1.msra.mxu0 %v119
  %441 = vmatprep.subr.mxu0 0.0
  %442 = vmatpush1.msra.mxu0 %v120
  %443 = vmatprep.subr.mxu0 0.0
  %444 = vmatpush1.msra.mxu0 %v121
  %445 = vmatprep.subr.mxu0 0.0
  %446 = vmatpush1.msra.mxu0 %v122
  %447 = vmatprep.subr.mxu0 0.0
  %448 = vmatpush1.msra.mxu0 0.0
  %449 = vmatprep.subr.mxu0 0.0
  %450 = vmatpush1.msra.mxu0 0.0
  %451 = vmatprep.subr.mxu0 0.0
  %452 = vmatpush1.msra.mxu0 0.0
  %453 = vmatprep.subr.mxu0 0.0
  %454 = vmatpush1.msra.mxu0 0.0
  %455 = vmatprep.subr.mxu0 0.0
  %456 = vmatpush1.msra.mxu0 0.0
  %457 = vmatprep.subr.mxu0 0.0
  %458 = vmatpush1.msra.mxu0 0.0
  %459 = vmatprep.subr.mxu0 0.0
  %460 = vmatpush1.msra.mxu0 0.0
  %461 = vmatprep.subr.mxu0 0.0
  %462 = vmatpush1.msra.mxu0 0.0
  %463 = vmatprep.subr.mxu0 0.0
  %464 = vmatpush1.msra.mxu0 0.0
  %465 = vmatprep.subr.mxu0 0.0
  %466 = vmatpush1.msra.mxu0 0.0
  %467 = vmatprep.subr.mxu0 0.0
  %468 = vmatpush1.msra.mxu0 0.0
  %469 = vmatprep.subr.mxu0 0.0
  %470 = vmatpush1.msra.mxu0 0.0
  %471 = vmatprep.subr.mxu0 0.0
  %472 = vmatpush1.msra.mxu0 0.0
  %473 = vmatprep.subr.mxu0 0.0
  %474 = vmatpush1.msra.mxu0 0.0
  %475 = vmatprep.subr.mxu0 0.0
  %476 = vmatpush1.msra.mxu0 0.0
  %477 = vmatprep.subr.mxu0 0.0
  %478 = vmatpush1.msra.mxu0 0.0
  %479 = vmatprep.subr.mxu0 0.0
  %480 = vmatpush1.msra.mxu0 0.0
  %481 = vmatprep.subr.mxu0 0.0
  %482 = vmatpush1.msra.mxu0 0.0
  %483 = vmatprep.subr.mxu0 0.0
  %484 = vmatpush1.msra.mxu0 0.0
  %485 = vmatprep.subr.mxu0 0.0
  %486 = vmatpush1.msra.mxu0 0.0
  %487 = vmatprep.subr.mxu0 0.0
  %488 = vmatpush1.msra.mxu0 0.0
  %489 = vmatprep.subr.mxu0 0.0
  %490 = vmatpush1.msra.mxu0 0.0
  %491 = vmatprep.subr.mxu0 0.0
  %492 = vmatpush1.msra.mxu0 0.0
  %493 = vmatprep.subr.mxu0 0.0
  %494 = vmatpush1.msra.mxu0 0.0
  %495 = vmatprep.subr.mxu0 0.0
  %496 = vmatpush1.msra.mxu0 0.0
  %497 = vmatprep.subr.mxu0 0.0
  %498 = vmatpush1.msra.mxu0 0.0
  %499 = vmatprep.subr.mxu0 0.0
  %500 = vmatpush1.msra.mxu0 0.0
  %501 = vmatprep.subr.mxu0 0.0
  %502 = vmatpush1.msra.mxu0 0.0
  %503 = vmatprep.mubr.f32.mxu0 0.0
  %504 = vmatmul.mubr.f32.gmra.mrb[0].mxu0 %v437
  %v505 = vpop.f32.mrb[0].mxu0
  %v506 = vadd.f32 0.0, %v505
  %v507 = vpop.f32.mrb[0].mxu0
  %508 = vdwg.mxu0
  %v509 = vadd.f32 %v116, %v506
  %v510 = vtanh.pop %v509
  %v512 = vsel %vm123, %v510, 0
  %514 = vmatprep.subr.mxu0 0.0
  %515 = vmatpush1.msra.mxu0 %v119
  %516 = vmatprep.subr.mxu0 0.0
  %517 = vmatpush1.msra.mxu0 %v120
  %518 = vmatprep.subr.mxu0 0.0
  %519 = vmatpush1.msra.mxu0 %v121
  %520 = vmatprep.subr.mxu0 0.0
  %521 = vmatpush1.msra.mxu0 %v122
  %522 = vmatprep.subr.mxu0 0.0
  %523 = vmatpush1.msra.mxu0 0.0
  %524 = vmatprep.subr.mxu0 0.0
  %525 = vmatpush1.msra.mxu0 0.0
  %526 = vmatprep.subr.mxu0 0.0
  %527 = vmatpush1.msra.mxu0 0.0
  %528 = vmatprep.subr.mxu0 0.0
  %529 = vmatpush1.msra.mxu0 0.0
  %530 = vmatprep.subr.mxu0 0.0
  %531 = vmatpush1.msra.mxu0 0.0
  %532 = vmatprep.subr.mxu0 0.0
  %533 = vmatpush1.msra.mxu0 0.0
  %534 = vmatprep.subr.mxu0 0.0
  %535 = vmatpush1.msra.mxu0 0.0
  %536 = vmatprep.subr.mxu0 0.0
  %537 = vmatpush1.msra.mxu0 0.0
  %538 = vmatprep.subr.mxu0 0.0
  %539 = vmatpush1.msra.mxu0 0.0
  %540 = vmatprep.subr.mxu0 0.0
  %541 = vmatpush1.msra.mxu0 0.0
  %542 = vmatprep.subr.mxu0 0.0
  %543 = vmatpush1.msra.mxu0 0.0
  %544 = vmatprep.subr.mxu0 0.0
  %545 = vmatpush1.msra.mxu0 0.0
  %546 = vmatprep.subr.mxu0 0.0
  %547 = vmatpush1.msra.mxu0 0.0
  %548 = vmatprep.subr.mxu0 0.0
  %549 = vmatpush1.msra.mxu0 0.0
  %550 = vmatprep.subr.mxu0 0.0
  %551 = vmatpush1.msra.mxu0 0.0
  %552 = vmatprep.subr.mxu0 0.0
  %553 = vmatpush1.msra.mxu0 0.0
  %554 = vmatprep.subr.mxu0 0.0
  %555 = vmatpush1.msra.mxu0 0.0
  %556 = vmatprep.subr.mxu0 0.0
  %557 = vmatpush1.msra.mxu0 0.0
  %558 = vmatprep.subr.mxu0 0.0
  %559 = vmatpush1.msra.mxu0 0.0
  %560 = vmatprep.subr.mxu0 0.0
  %561 = vmatpush1.msra.mxu0 0.0
  %562 = vmatprep.subr.mxu0 0.0
  %563 = vmatpush1.msra.mxu0 0.0
  %564 = vmatprep.subr.mxu0 0.0
  %565 = vmatpush1.msra.mxu0 0.0
  %566 = vmatprep.subr.mxu0 0.0
  %567 = vmatpush1.msra.mxu0 0.0
  %568 = vmatprep.subr.mxu0 0.0
  %569 = vmatpush1.msra.mxu0 0.0
  %570 = vmatprep.subr.mxu0 0.0
  %571 = vmatpush1.msra.mxu0 0.0
  %572 = vmatprep.subr.mxu0 0.0
  %573 = vmatpush1.msra.mxu0 0.0
  %574 = vmatprep.subr.mxu0 0.0
  %575 = vmatpush1.msra.mxu0 0.0
  %576 = vmatprep.subr.mxu0 0.0
  %577 = vmatpush1.msra.mxu0 0.0
  %578 = vmatprep.mubr.f32.mxu0 0.0
  %579 = vmatmul.mubr.f32.gmra.mrb[0].mxu0 %v512
  %v580 = vpop.f32.mrb[0].mxu0
  %v581 = vadd.f32 0.0, %v580
  %v582 = vpop.f32.mrb[0].mxu0
  %583 = vdwg.mxu0
  %v585 = vrot.slane %v581, 6
  %v587 = vadd.f32 %v116, %v585
  %v588 = vtanh.pop %v587
  %v590 = vrot.slane %v588, 2
  %v591 = vsel %vm123, %v590, 0
  %593 = vmatprep.subr.mxu0 0.0
  %594 = vmatpush1.msra.mxu0 %v119
  %595 = vmatprep.subr.mxu0 0.0
  %596 = vmatpush1.msra.mxu0 %v120
  %597 = vmatprep.subr.mxu0 0.0
  %598 = vmatpush1.msra.mxu0 %v121
  %599 = vmatprep.subr.mxu0 0.0
  %600 = vmatpush1.msra.mxu0 %v122
  %601 = vmatprep.subr.mxu0 0.0
  %602 = vmatpush1.msra.mxu0 0.0
  %603 = vmatprep.subr.mxu0 0.0
  %604 = vmatpush1.msra.mxu0 0.0
  %605 = vmatprep.subr.mxu0 0.0
  %606 = vmatpush1.msra.mxu0 0.0
  %607 = vmatprep.subr.mxu0 0.0
  %608 = vmatpush1.msra.mxu0 0.0
  %609 = vmatprep.subr.mxu0 0.0
  %610 = vmatpush1.msra.mxu0 0.0
  %611 = vmatprep.subr.mxu0 0.0
  %612 = vmatpush1.msra.mxu0 0.0
  %613 = vmatprep.subr.mxu0 0.0
  %614 = vmatpush1.msra.mxu0 0.0
  %615 = vmatprep.subr.mxu0 0.0
  %616 = vmatpush1.msra.mxu0 0.0
  %617 = vmatprep.subr.mxu0 0.0
  %618 = vmatpush1.msra.mxu0 0.0
  %619 = vmatprep.subr.mxu0 0.0
  %620 = vmatpush1.msra.mxu0 0.0
  %621 = vmatprep.subr.mxu0 0.0
  %622 = vmatpush1.msra.mxu0 0.0
  %623 = vmatprep.subr.mxu0 0.0
  %624 = vmatpush1.msra.mxu0 0.0
  %625 = vmatprep.subr.mxu0 0.0
  %626 = vmatpush1.msra.mxu0 0.0
  %627 = vmatprep.subr.mxu0 0.0
  %628 = vmatpush1.msra.mxu0 0.0
  %629 = vmatprep.subr.mxu0 0.0
  %630 = vmatpush1.msra.mxu0 0.0
  %631 = vmatprep.subr.mxu0 0.0
  %632 = vmatpush1.msra.mxu0 0.0
  %633 = vmatprep.subr.mxu0 0.0
  %634 = vmatpush1.msra.mxu0 0.0
  %635 = vmatprep.subr.mxu0 0.0
  %636 = vmatpush1.msra.mxu0 0.0
  %637 = vmatprep.subr.mxu0 0.0
  %638 = vmatpush1.msra.mxu0 0.0
  %639 = vmatprep.subr.mxu0 0.0
  %640 = vmatpush1.msra.mxu0 0.0
  %641 = vmatprep.subr.mxu0 0.0
  %642 = vmatpush1.msra.mxu0 0.0
  %643 = vmatprep.subr.mxu0 0.0
  %644 = vmatpush1.msra.mxu0 0.0
  %645 = vmatprep.subr.mxu0 0.0
  %646 = vmatpush1.msra.mxu0 0.0
  %647 = vmatprep.subr.mxu0 0.0
  %648 = vmatpush1.msra.mxu0 0.0
  %649 = vmatprep.subr.mxu0 0.0
  %650 = vmatpush1.msra.mxu0 0.0
  %651 = vmatprep.subr.mxu0 0.0
  %652 = vmatpush1.msra.mxu0 0.0
  %653 = vmatprep.subr.mxu0 0.0
  %654 = vmatpush1.msra.mxu0 0.0
  %655 = vmatprep.subr.mxu0 0.0
  %656 = vmatpush1.msra.mxu0 0.0
  %657 = vmatprep.mubr.f32.mxu0 0.0
  %658 = vmatmul.mubr.f32.gmra.mrb[0].mxu0 %v591
  %v659 = vpop.f32.mrb[0].mxu0
  %v660 = vadd.f32 0.0, %v659
  %v661 = vpop.f32.mrb[0].mxu0
  %662 = vdwg.mxu0
  %v664 = vrot.slane %v660, 4
  %v666 = vadd.f32 %v116, %v664
  %v667 = vtanh.pop %v666
  %v669 = vrot.slane %v667, 4
  %v670 = vsel %vm123, %v669, 0
  %672 = vmatprep.subr.mxu0 0.0
  %673 = vmatpush1.msra.mxu0 %v119
  %674 = vmatprep.subr.mxu0 0.0
  %675 = vmatpush1.msra.mxu0 %v120
  %676 = vmatprep.subr.mxu0 0.0
  %677 = vmatpush1.msra.mxu0 %v121
  %678 = vmatprep.subr.mxu0 0.0
  %679 = vmatpush1.msra.mxu0 %v122
  %680 = vmatprep.subr.mxu0 0.0
  %681 = vmatpush1.msra.mxu0 0.0
  %682 = vmatprep.subr.mxu0 0.0
  %683 = vmatpush1.msra.mxu0 0.0
  %684 = vmatprep.subr.mxu0 0.0
  %685 = vmatpush1.msra.mxu0 0.0
  %686 = vmatprep.subr.mxu0 0.0
  %687 = vmatpush1.msra.mxu0 0.0
  %688 = vmatprep.subr.mxu0 0.0
  %689 = vmatpush1.msra.mxu0 0.0
  %690 = vmatprep.subr.mxu0 0.0
  %691 = vmatpush1.msra.mxu0 0.0
  %692 = vmatprep.subr.mxu0 0.0
  %693 = vmatpush1.msra.mxu0 0.0
  %694 = vmatprep.subr.mxu0 0.0
  %695 = vmatpush1.msra.mxu0 0.0
  %696 = vmatprep.subr.mxu0 0.0
  %697 = vmatpush1.msra.mxu0 0.0
  %698 = vmatprep.subr.mxu0 0.0
  %699 = vmatpush1.msra.mxu0 0.0
  %700 = vmatprep.subr.mxu0 0.0
  %701 = vmatpush1.msra.mxu0 0.0
  %702 = vmatprep.subr.mxu0 0.0
  %703 = vmatpush1.msra.mxu0 0.0
  %704 = vmatprep.subr.mxu0 0.0
  %705 = vmatpush1.msra.mxu0 0.0
  %706 = vmatprep.subr.mxu0 0.0
  %707 = vmatpush1.msra.mxu0 0.0
  %708 = vmatprep.subr.mxu0 0.0
  %709 = vmatpush1.msra.mxu0 0.0
  %710 = vmatprep.subr.mxu0 0.0
  %711 = vmatpush1.msra.mxu0 0.0
  %712 = vmatprep.subr.mxu0 0.0
  %713 = vmatpush1.msra.mxu0 0.0
  %714 = vmatprep.subr.mxu0 0.0
  %715 = vmatpush1.msra.mxu0 0.0
  %716 = vmatprep.subr.mxu0 0.0
  %717 = vmatpush1.msra.mxu0 0.0
  %718 = vmatprep.subr.mxu0 0.0
  %719 = vmatpush1.msra.mxu0 0.0
  %720 = vmatprep.subr.mxu0 0.0
  %721 = vmatpush1.msra.mxu0 0.0
  %722 = vmatprep.subr.mxu0 0.0
  %723 = vmatpush1.msra.mxu0 0.0
  %724 = vmatprep.subr.mxu0 0.0
  %725 = vmatpush1.msra.mxu0 0.0
  %726 = vmatprep.subr.mxu0 0.0
  %727 = vmatpush1.msra.mxu0 0.0
  %728 = vmatprep.subr.mxu0 0.0
  %729 = vmatpush1.msra.mxu0 0.0
  %730 = vmatprep.subr.mxu0 0.0
  %731 = vmatpush1.msra.mxu0 0.0
  %732 = vmatprep.subr.mxu0 0.0
  %733 = vmatpush1.msra.mxu0 0.0
  %734 = vmatprep.subr.mxu0 0.0
  %735 = vmatpush1.msra.mxu0 0.0
  %736 = vmatprep.mubr.f32.mxu0 0.0
  %737 = vmatmul.mubr.f32.gmra.mrb[0].mxu0 %v670
  %v738 = vpop.f32.mrb[0].mxu0
  %v739 = vadd.f32 0.0, %v738
  %v740 = vpop.f32.mrb[0].mxu0
  %741 = vdwg.mxu0
  %v743 = vrot.slane %v739, 2
  %v745 = vadd.f32 %v116, %v743
  %v746 = vtanh.pop %v745
  %vm747 = vcmask 1041408
  %v748 = vsel %vm747, %v198, %v276
  %v749 = vsel %vm40, %v748, %v355
  %vm750 = vcmask 1045504
  %v751 = vsel %vm750, %v749, %v434
  %v752 = vsel %vm747, %v510, %v588
  %v753 = vsel %vm40, %v752, %v667
  %v754 = vsel %vm750, %v753, %v746
  %v755 = vld [vmem:[%s4] sm:$0xff]
  %v756 = vld [vmem:[%s4 + $0x8] sm:$0xff]
  %v757 = vld [vmem:[%s4 + $0x10] sm:$0xff]
  %v758 = vld [vmem:[%s4 + $0x18] sm:$0xff]
  %v759 = vld [vmem:[%s5] sm:$0x1]
  %v761 = vlaneseq
  %v762 = vshrl.u32 %v761, 7
  %v763 = vsub.s32 0, %v762
  %v764 = vrot.slane %v759, %v763
  %v767 = vsel %vm123, %v751, 0
  %v770 = vsel %vm123, %v754, 0
  %772 = vmatprep.subr.mxu0 0.0
  %773 = vmatpush1.msra.mxu0 %v755
  %774 = vmatprep.subr.mxu0 0.0
  %775 = vmatpush1.msra.mxu0 %v756
  %776 = vmatprep.subr.mxu0 0.0
  %777 = vmatpush1.msra.mxu0 %v757
  %778 = vmatprep.subr.mxu0 0.0
  %779 = vmatpush1.msra.mxu0 %v758
  %780 = vmatprep.subr.mxu0 0.0
  %781 = vmatpush1.msra.mxu0 0.0
  %782 = vmatprep.subr.mxu0 0.0
  %783 = vmatpush1.msra.mxu0 0.0
  %784 = vmatprep.subr.mxu0 0.0
  %785 = vmatpush1.msra.mxu0 0.0
  %786 = vmatprep.subr.mxu0 0.0
  %787 = vmatpush1.msra.mxu0 0.0
  %788 = vmatprep.subr.mxu0 0.0
  %789 = vmatpush1.msra.mxu0 0.0
  %790 = vmatprep.subr.mxu0 0.0
  %791 = vmatpush1.msra.mxu0 0.0
  %792 = vmatprep.subr.mxu0 0.0
  %793 = vmatpush1.msra.mxu0 0.0
  %794 = vmatprep.subr.mxu0 0.0
  %795 = vmatpush1.msra.mxu0 0.0
  %796 = vmatprep.subr.mxu0 0.0
  %797 = vmatpush1.msra.mxu0 0.0
  %798 = vmatprep.subr.mxu0 0.0
  %799 = vmatpush1.msra.mxu0 0.0
  %800 = vmatprep.subr.mxu0 0.0
  %801 = vmatpush1.msra.mxu0 0.0
  %802 = vmatprep.subr.mxu0 0.0
  %803 = vmatpush1.msra.mxu0 0.0
  %804 = vmatprep.subr.mxu0 0.0
  %805 = vmatpush1.msra.mxu0 0.0
  %806 = vmatprep.subr.mxu0 0.0
  %807 = vmatpush1.msra.mxu0 0.0
  %808 = vmatprep.subr.mxu0 0.0
  %809 = vmatpush1.msra.mxu0 0.0
  %810 = vmatprep.subr.mxu0 0.0
  %811 = vmatpush1.msra.mxu0 0.0
  %812 = vmatprep.subr.mxu0 0.0
  %813 = vmatpush1.msra.mxu0 0.0
  %814 = vmatprep.subr.mxu0 0.0
  %815 = vmatpush1.msra.mxu0 0.0
  %816 = vmatprep.subr.mxu0 0.0
  %817 = vmatpush1.msra.mxu0 0.0
  %818 = vmatprep.subr.mxu0 0.0
  %819 = vmatpush1.msra.mxu0 0.0
  %820 = vmatprep.subr.mxu0 0.0
  %821 = vmatpush1.msra.mxu0 0.0
  %822 = vmatprep.subr.mxu0 0.0
  %823 = vmatpush1.msra.mxu0 0.0
  %824 = vmatprep.subr.mxu0 0.0
  %825 = vmatpush1.msra.mxu0 0.0
  %826 = vmatprep.subr.mxu0 0.0
  %827 = vmatpush1.msra.mxu0 0.0
  %828 = vmatprep.subr.mxu0 0.0
  %829 = vmatpush1.msra.mxu0 0.0
  %830 = vmatprep.subr.mxu0 0.0
  %831 = vmatpush1.msra.mxu0 0.0
  %832 = vmatprep.subr.mxu0 0.0
  %833 = vmatpush1.msra.mxu0 0.0
  %834 = vmatprep.subr.mxu0 0.0
  %835 = vmatpush1.msra.mxu0 0.0
  %836 = vmatprep.mubr.f32.mxu0 0.0
  %837 = vmatmul.mubr.f32.gmra.mrb[0].mxu0 %v767
  %v838 = vpop.f32.mrb[0].mxu0
  %v839 = vadd.f32 %v764, %v838
  %v840 = vpop.f32.mrb[0].mxu0
  %841 = vmatprep.mubr.f32.mxu0 0.0
  %842 = vmatmul.mubr.f32.gmra.mrb[0].mxu0 %v770
  %v843 = vpop.f32.mrb[0].mxu0
  %v844 = vadd.f32 %v764, %v843
  %v845 = vpop.f32.mrb[0].mxu0
  %846 = vdwg.mxu0
  %847 = vst.msk [vmem:[%s6] sm:$0xff] %vm33, %v839
  %848 = vst.msk [vmem:[%s6 + $0x8] sm:$0xff] %vm33, %v844
  // Predicated region
  $region26: #{tpu_custom_call.1} parent=0 // pred_check
    _
  $region27: #{tpu_custom_call.1} parent=0 // pred_check_branch
    %850 = sbr.rel (0) target = $region29
  $region28: #{tpu_custom_call.1} parent=0 // pred_region
    _
  $region29: #{tpu_custom_call.1} parent=0 // pred_fallthru
    _
  // Predicated region
  $region30: #{tpu_custom_call.1} parent=0 // pred_check
    _
  $region31: #{tpu_custom_call.1} parent=0 // pred_check_branch
    %852 = sbr.rel (0) target = $region33
  $region32: #{tpu_custom_call.1} parent=0 // pred_region
    _
  $region33: #{tpu_custom_call.1} parent=0 // pred_fallthru
    _

</llo_original>
